<compile_context>
chip_gen: v7x
topology: tpu7x:2x2x1
jax: 0.10.0
libtpu: 0.0.40
codegen_flags: <defaults>
</compile_context>

<pallas_src>
import math

import jax
import jax.numpy as jnp
import numpy as np
from jax import lax
from jax.experimental import pallas as pl
from jax.experimental.pallas import tpu as pltpu

TIME_DIM = 64                 # Absolute_attention default time_dim
LN_EPS = 1e-5                 # nn.LayerNorm default eps
VMEM_LIMIT = 48 * 1024 * 1024 # scoped VMEM (default is only 16/32 MiB)


# --------------------------- helpers (per-layer constants) ---------------------------

def _group_width(dim, hd):
    """Head-group lane width for the mix kernel.

    Must be a multiple of 128 (or equal dim) so the qsum/V column slices
    satisfy the (8,128) BlockSpec rule, and a multiple of hd so groups contain
    whole heads.  ~MXU-width groups keep the block-diagonal fused matmuls
    lane-dense without wasting MXU passes for typical hd.
    """
    if dim <= 128:
        return dim
    for cand in (256, 128):
        if dim % cand == 0 and cand % hd == 0:
            return cand
    return dim
    # TODO(synk): for very small hd (many heads per group) a per-head-streamed
    # variant would save MXU FLOPs; at the shapes used here it is negligible.


def _build_group_time(time_angle, head_time_delta, seq_len, hd, group_heads):
    """time = cat([cos+sin, cos-sin], -1)/sqrt(hd), grouped by head group.

    Returns time_g [G, L, Hg*2T] and its per-group transpose time_T_g
    [G, Hg*2T, L] (pre-transposed so the in-kernel reduction over L is a plain
    matmul with no XLU transpose)."""
    H, T = time_angle.shape
    ar = jnp.arange(seq_len, dtype=jnp.float32)
    ta = (ar[:, None, None] + head_time_delta[None, :, None]) * time_angle[None, :, :]
    cos, sin = jnp.cos(ta), jnp.sin(ta)
    t = jnp.concatenate([cos + sin, cos - sin], axis=-1) / math.sqrt(hd)  # [L, H, 2T]
    G = H // group_heads
    t4 = jnp.transpose(t.reshape(seq_len, G, group_heads, 2 * T), (1, 0, 2, 3))
    time_g = t4.reshape(G, seq_len, group_heads * 2 * T)
    time_T_g = jnp.transpose(time_g, (0, 2, 1))
    return time_g.astype(jnp.bfloat16), time_T_g.astype(jnp.bfloat16)


# ----------------------- kernel 1: Q/V projections (lane-dense qsum) -----------------------

def _projection_kernel(x_ref, wq_ref, wv_ref, s_ref, qsum_ref, v_ref):
    """qsum_bcast = sigmoid(x@Wq) @ S_bcast ;  v = x@Wv   (bf16 MXU, f32 acc).

    S_bcast is a [D, D] block-broadcast head-sum matrix with the 1/hd fold, so
    the qsum output is already broadcast to [tl, D] (lane-dense stores)."""
    x = x_ref[0]                                                       # [tl, D] bf16
    q_lin = jnp.dot(x, wq_ref[...], preferred_element_type=jnp.float32)
    q_sig = jax.nn.sigmoid(q_lin).astype(jnp.bfloat16)
    qsum_ref[0] = jnp.dot(q_sig, s_ref[...],
                          preferred_element_type=jnp.float32).astype(jnp.bfloat16)
    v_ref[0] = jnp.dot(x, wv_ref[...],
                       preferred_element_type=jnp.float32).astype(jnp.bfloat16)


def _project(x, wq_bf16, wv_bf16, s_bcast):
    B, L, D = x.shape
    tl = min(512, L)                       # row tile; tail blocks are padded (row-wise op)
    return pl.pallas_call(
        _projection_kernel,
        out_shape=(jax.ShapeDtypeStruct((B, L, D), jnp.bfloat16),
                   jax.ShapeDtypeStruct((B, L, D), jnp.bfloat16)),
        grid=(B, pl.cdiv(L, tl)),
        in_specs=[
            pl.BlockSpec((1, tl, D), lambda b, i: (b, i, 0)),   # x
            pl.BlockSpec((D, D), lambda b, i: (0, 0)),          # Wq
            pl.BlockSpec((D, D), lambda b, i: (0, 0)),          # Wv
            pl.BlockSpec((D, D), lambda b, i: (0, 0)),          # block-broadcast head sum
        ],
        out_specs=(pl.BlockSpec((1, tl, D), lambda b, i: (b, i, 0)),
                   pl.BlockSpec((1, tl, D), lambda b, i: (b, i, 0))),
        compiler_params=pltpu.CompilerParams(
            dimension_semantics=("parallel", "parallel"),
            vmem_limit_bytes=VMEM_LIMIT),
    )(x, wq_bf16, wv_bf16, s_bcast)


# -------- kernel 2: head-group time mixing + deferred O + LayerNorm + residual --------

def _mix_kernel(x_ref, qsum_ref, v_ref, tT_ref, t_ref, mask_ref, wo_ref,
                gamma_ref, beta_ref, o_ref, acc_ref):
    g = pl.program_id(1)

    @pl.when(g == 0)
    def _init():
        acc_ref[...] = jnp.zeros_like(acc_ref)

    # Linear-attention reassociation, fused over the Hg heads of this group via
    # a block-diagonal "m" operand (lane-dense, no per-head loop):
    #   m_full = time_T_g @ v_g            [Hg*2T, W]   (contraction over L)
    #   m      = m_full * blockmask        zero cross-head terms
    #   u      = time_g @ m                [L, W]
    m = jnp.dot(tT_ref[0], v_ref[0], preferred_element_type=jnp.float32)
    m = (m * mask_ref[...]).astype(jnp.bfloat16)
    # TODO(synk): m is rounded to bf16 for the second MXU matmul; keep it f32
    # (at ~6x MXU cost) if tighter fidelity to the f32 reference is needed.
    u = jnp.dot(t_ref[0], m, preferred_element_type=jnp.float32)          # [L, W]
    adding = (qsum_ref[0].astype(jnp.float32) * u).astype(jnp.bfloat16)   # [L, W]

    # Deferred O projection: one K=W slab per group into the resident f32
    # accumulator (instead of H K=hd matmuls + H f32 RMW passes).
    acc_ref[...] += jnp.dot(adding, wo_ref[0], preferred_element_type=jnp.float32)

    @pl.when(g == pl.num_programs(1) - 1)
    def _finalize():
        out = acc_ref[...]
        mean = jnp.mean(out, axis=-1, keepdims=True)
        var = jnp.mean((out - mean) ** 2, axis=-1, keepdims=True)
        ln = (out - mean) * lax.rsqrt(var + LN_EPS)
        ln = ln * gamma_ref[...] + beta_ref[...]
        # TODO(synk): nn.Dropout(p=0.5) is eval-mode identity here; training
        # mode random masking is not reproduced.
        # Residual from Absolute_bert: tensor = tensor + layer_output.
        o_ref[0] = (x_ref[0].astype(jnp.float32) + ln).astype(o_ref.dtype)


def _mix(x, qsum_b, v, time_T_g, time_g, mask, wo_g, gamma, beta):
    B, L, D = x.shape
    G, W, _ = wo_g.shape
    Hg2T = time_T_g.shape[1]
    # TODO(synk): for very long L on v7x (64 MiB VMEM) split this into an
    # m-precompute kernel + an L-tiled finalize kernel per the review.
    return pl.pallas_call(
        _mix_kernel,
        out_shape=jax.ShapeDtypeStruct((B, L, D), jnp.bfloat16),
        grid=(B, G),
        in_specs=[
            pl.BlockSpec((1, L, D), lambda b, g: (b, 0, 0)),      # x (residual)
            pl.BlockSpec((1, L, W), lambda b, g: (b, 0, g)),      # qsum group columns
            pl.BlockSpec((1, L, W), lambda b, g: (b, 0, g)),      # V group columns
            pl.BlockSpec((1, Hg2T, L), lambda b, g: (g, 0, 0)),   # time^T (group)
            pl.BlockSpec((1, L, Hg2T), lambda b, g: (g, 0, 0)),   # time   (group)
            pl.BlockSpec((Hg2T, W), lambda b, g: (0, 0)),         # block-diag head mask
            pl.BlockSpec((1, W, D), lambda b, g: (g, 0, 0)),      # Wo rows for group
            pl.BlockSpec((1, D), lambda b, g: (0, 0)),            # LN gamma
            pl.BlockSpec((1, D), lambda b, g: (0, 0)),            # LN beta
        ],
        out_specs=pl.BlockSpec((1, L, D), lambda b, g: (b, 0, 0)),
        scratch_shapes=[pltpu.VMEM((L, D), jnp.float32)],
        compiler_params=pltpu.CompilerParams(
            dimension_semantics=("parallel", "arbitrary"),
            vmem_limit_bytes=VMEM_LIMIT),
    )(x, qsum_b, v, time_T_g, time_g, mask, wo_g, gamma, beta)


# ------------------------------ model wrapper ------------------------------

def absolute_attention_layer(x, layer):
    """x: [B, L, D] bf16 -> [B, L, D] bf16 (attention + LN + residual)."""
    B, L, D = x.shape
    hd = layer["hidden_dim"]
    H = layer["num_heads"]
    W = _group_width(D, hd)         # lanes per head group
    Hg = W // hd                    # heads per group
    G = D // W                      # number of head groups
    T2 = 2 * TIME_DIM

    # Block-broadcast head-sum matrix with the 1/hd scale folded in.
    head_of_col = jnp.arange(D) // hd
    s_bcast = ((head_of_col[:, None] == head_of_col[None, :])
               .astype(jnp.float32) / hd).astype(jnp.bfloat16)         # [D, D]

    wq = layer["wq"].astype(jnp.bfloat16)
    wv = layer["wv"].astype(jnp.bfloat16)
    wo_g = layer["wo"].reshape(G, W, D).astype(jnp.bfloat16)           # per-group O rows

    time_g, time_T_g = _build_group_time(layer["time_angle"],
                                         layer["head_time_delta"], L, hd, Hg)

    # Block-diagonal mask: m row a*2T+d (head a within group) only feeds that
    # head's own output columns.  Same for every group.
    row_head = jnp.arange(Hg * T2) // T2
    col_head = jnp.arange(W) // hd
    mask = (row_head[:, None] == col_head[None, :]).astype(jnp.float32)  # [Hg*2T, W]

    qsum_b, v = _project(x, wq, wv, s_bcast)            # both [B, L, D] bf16, lane-dense
    gamma = layer["ln_gamma"].reshape(1, D).astype(jnp.float32)
    beta = layer["ln_beta"].reshape(1, D).astype(jnp.float32)
    return _mix(x, qsum_b, v, time_T_g, time_g, mask, wo_g, gamma, beta)


def init_params(key, vocab_size, dim, depth, log_granularity):
    keys = jax.random.split(key, 1 + depth)
    # nn.Embedding with xavier_normal init.
    emb = jax.random.normal(keys[0], (vocab_size, dim), jnp.float32) * \
        math.sqrt(2.0 / (vocab_size + dim))
    layers = []
    for i, gran in enumerate(log_granularity):
        hd = 2 ** gran
        num_heads = dim // hd
        lk = jax.random.split(keys[1 + i], 6)
        bound = 1.0 / math.sqrt(dim)
        layers.append(dict(
            num_heads=num_heads, hidden_dim=hd,
            time_angle=jax.random.uniform(lk[0], (num_heads, TIME_DIM), jnp.float32),
            head_time_delta=jax.random.uniform(lk[1], (num_heads,), jnp.float32),
            wq=jax.random.uniform(lk[2], (dim, dim), jnp.float32, -bound, bound),
            wk=jax.random.uniform(lk[3], (dim, dim), jnp.float32, -bound, bound),  # dead branch
            wv=jax.random.uniform(lk[4], (dim, dim), jnp.float32, -bound, bound),
            wo=jax.random.uniform(lk[5], (dim, dim), jnp.float32, -bound, bound),
            ln_gamma=jnp.ones((dim,), jnp.float32),
            ln_beta=jnp.zeros((dim,), jnp.float32),
        ))
    # Masked-LM head bias (declared but never applied in the PyTorch forward).
    lm_bias = jnp.zeros((vocab_size,), jnp.float32)
    return dict(embedding=emb, layers=layers, lm_bias=lm_bias)


def absolute_bert_for_masked_lm(input_ids, attention_mask, params, labels=None):
    # attention_mask only feeds the dead K branch of the reference forward,
    # so it cannot affect the output.
    del attention_mask
    x = params["embedding"][input_ids].astype(jnp.bfloat16)   # [B, L, D] bf16 activations
    for layer in params["layers"]:
        x = absolute_attention_layer(x, layer)
    return x.astype(jnp.float32), labels


# ------------------------------ pure-JAX reference ------------------------------

def reference_forward(input_ids, attention_mask, params):
    """f32 transcription of the PyTorch forward (eval mode)."""
    del attention_mask
    x = params["embedding"][input_ids]
    B, L = input_ids.shape
    dim = x.shape[-1]
    for layer in params["layers"]:
        H, hd = layer["num_heads"], layer["hidden_dim"]
        q = jax.nn.sigmoid(x @ layer["wq"]).reshape(B, L, H, hd) / hd
        ta = (jnp.arange(L, dtype=jnp.float32)[:, None, None]
              + layer["head_time_delta"][None, :, None]) * layer["time_angle"][None, :, :]
        cos, sin = jnp.cos(ta), jnp.sin(ta)
        time = jnp.concatenate([cos + sin, cos - sin], axis=-1) / math.sqrt(hd)
        qs = q.sum(-1)[..., None] * time[None]                 # [B,L,H,2T]
        k_time = time                                          # reference reuses time_angles
        attn = jnp.einsum("blhd,thd->blth", qs, k_time)
        v = (x @ layer["wv"]).reshape(B, L, H, hd)
        adding = jnp.einsum("blth,bthd->blhd", attn, v).reshape(B, L, dim)
        out = adding @ layer["wo"]
        mean = out.mean(-1, keepdims=True)
        var = ((out - mean) ** 2).mean(-1, keepdims=True)
        ln = (out - mean) / jnp.sqrt(var + LN_EPS)
        ln = ln * layer["ln_gamma"] + layer["ln_beta"]
        x = x + ln
    return x


if __name__ == "__main__":
    vocab_size, dim, depth = 50, 32, 2
    log_granularity = [1, 2]          # heads/hidden per layer: (16,2), (8,4)
    B, L = 2, 8

    key = jax.random.PRNGKey(0)
    kp, ki = jax.random.split(key)
    params = init_params(kp, vocab_size, dim, depth, log_granularity)
    input_ids = jax.random.randint(ki, (B, L), 0, vocab_size)
    attention_mask = jnp.ones((B, L), jnp.float32)

    out, labels = absolute_bert_for_masked_lm(input_ids, attention_mask, params)
    out = jax.block_until_ready(out)

    ref = reference_forward(input_ids, attention_mask, params)
    assert out.shape == (B, L, dim) and labels is None
    out_f32 = np.asarray(out).astype(np.float32)
    ref_f32 = np.asarray(ref).astype(np.float32)
    max_err = float(np.max(np.abs(out_f32 - ref_f32)))
    # bf16 activations/weights end-to-end (f32 accumulation) vs a pure-f32
    # reference => looser tolerance.
    assert np.allclose(out_f32, ref_f32, rtol=5e-2, atol=1e-1), max_err
    print("KERNEL_OK")
</pallas_src>

<mosaic_0001>
module attributes {stable_mosaic.version = 11 : i64} {
  func.func @_projection_kernel(%arg0: i32, %arg1: i32, %arg2: memref<1x8x32xbf16, #tpu.memory_space<vmem>>, %arg3: memref<32x32xbf16, #tpu.memory_space<vmem>>, %arg4: memref<32x32xbf16, #tpu.memory_space<vmem>>, %arg5: memref<32x32xbf16, #tpu.memory_space<vmem>>, %arg6: memref<1x8x32xbf16, #tpu.memory_space<vmem>>, %arg7: memref<1x8x32xbf16, #tpu.memory_space<vmem>>) attributes {dimension_semantics = [#tpu.dimension_semantics<parallel>, #tpu.dimension_semantics<parallel>], iteration_bounds = array<i64: 2, 1>, scalar_prefetch = 0 : i64, scratch_operands = 0 : i64, tpu.core_type = #tpu.core_type<tc>, window_params = [{transform_indices = @transform_0, window_bounds = array<i64: 1, 8, 32>}, {pipeline_mode = #tpu.pipeline_mode<synchronous>, transform_indices = @transform_1, window_bounds = array<i64: 32, 32>}, {pipeline_mode = #tpu.pipeline_mode<synchronous>, transform_indices = @transform_2, window_bounds = array<i64: 32, 32>}, {pipeline_mode = #tpu.pipeline_mode<synchronous>, transform_indices = @transform_3, window_bounds = array<i64: 32, 32>}, {transform_indices = @transform_4, window_bounds = array<i64: 1, 8, 32>}, {transform_indices = @transform_5, window_bounds = array<i64: 1, 8, 32>}]} {
    %c0 = arith.constant 0 : index
    %c0_0 = arith.constant 0 : index
    %c0_1 = arith.constant 0 : index
    %0 = vector.load %arg2[%c0, %c0_0, %c0_1] : memref<1x8x32xbf16, #tpu.memory_space<vmem>>, vector<1x8x32xbf16>
    %1 = vector.shape_cast %0 : vector<1x8x32xbf16> to vector<8x32xbf16>
    %c0_2 = arith.constant 0 : index
    %c0_3 = arith.constant 0 : index
    %2 = vector.load %arg3[%c0_2, %c0_3] : memref<32x32xbf16, #tpu.memory_space<vmem>>, vector<32x32xbf16>
    %cst = arith.constant dense<0.000000e+00> : vector<8x32xf32>
    %3 = tpu.matmul %1, %2, %cst {dimension_numbers = #tpu.dot_dimension_numbers<[1], [0], [0], [1], [0, 0, 1, 1], [], []>} : vector<8x32xbf16>, vector<32x32xbf16>, vector<8x32xf32> -> vector<8x32xf32>
    %4 = arith.negf %3 : vector<8x32xf32>
    %5 = math.exp %4 : vector<8x32xf32>
    %cst_4 = arith.constant 1.000000e+00 : f32
    %6 = vector.broadcast %cst_4 : f32 to vector<8x32xf32>
    %7 = arith.addf %6, %5 : vector<8x32xf32>
    %8 = arith.divf %6, %7 : vector<8x32xf32>
    %9 = arith.truncf %8 : vector<8x32xf32> to vector<8x32xbf16>
    %c0_5 = arith.constant 0 : index
    %c0_6 = arith.constant 0 : index
    %10 = vector.load %arg5[%c0_5, %c0_6] : memref<32x32xbf16, #tpu.memory_space<vmem>>, vector<32x32xbf16>
    %cst_7 = arith.constant dense<0.000000e+00> : vector<8x32xf32>
    %11 = tpu.matmul %9, %10, %cst_7 {dimension_numbers = #tpu.dot_dimension_numbers<[1], [0], [0], [1], [0, 0, 1, 1], [], []>} : vector<8x32xbf16>, vector<32x32xbf16>, vector<8x32xf32> -> vector<8x32xf32>
    %12 = arith.truncf %11 : vector<8x32xf32> to vector<8x32xbf16>
    %c0_8 = arith.constant 0 : index
    %c0_9 = arith.constant 0 : index
    %c0_10 = arith.constant 0 : index
    %13 = vector.load %arg6[%c0_8, %c0_9, %c0_10] : memref<1x8x32xbf16, #tpu.memory_space<vmem>>, vector<1x8x32xbf16>
    %14 = vector.shape_cast %13 : vector<1x8x32xbf16> to vector<8x32xbf16>
    %15 = vector.shape_cast %12 : vector<8x32xbf16> to vector<1x8x32xbf16>
    tpu.vector_store %arg6[%c0_8, %c0_9, %c0_10], %15 {strides = array<i32>} : memref<1x8x32xbf16, #tpu.memory_space<vmem>>, vector<1x8x32xbf16>,
    %c0_11 = arith.constant 0 : index
    %c0_12 = arith.constant 0 : index
    %16 = vector.load %arg4[%c0_11, %c0_12] : memref<32x32xbf16, #tpu.memory_space<vmem>>, vector<32x32xbf16>
    %cst_13 = arith.constant dense<0.000000e+00> : vector<8x32xf32>
    %17 = tpu.matmul %1, %16, %cst_13 {dimension_numbers = #tpu.dot_dimension_numbers<[1], [0], [0], [1], [0, 0, 1, 1], [], []>} : vector<8x32xbf16>, vector<32x32xbf16>, vector<8x32xf32> -> vector<8x32xf32>
    %18 = arith.truncf %17 : vector<8x32xf32> to vector<8x32xbf16>
    %c0_14 = arith.constant 0 : index
    %c0_15 = arith.constant 0 : index
    %c0_16 = arith.constant 0 : index
    %19 = vector.load %arg7[%c0_14, %c0_15, %c0_16] : memref<1x8x32xbf16, #tpu.memory_space<vmem>>, vector<1x8x32xbf16>
    %20 = vector.shape_cast %19 : vector<1x8x32xbf16> to vector<8x32xbf16>
    %21 = vector.shape_cast %18 : vector<8x32xbf16> to vector<1x8x32xbf16>
    tpu.vector_store %arg7[%c0_14, %c0_15, %c0_16], %21 {strides = array<i32>} : memref<1x8x32xbf16, #tpu.memory_space<vmem>>, vector<1x8x32xbf16>,
    return
  }
  func.func @transform_0(%arg0: i32, %arg1: i32) -> (i32, i32, i32) {
    %c0_i32 = arith.constant 0 : i32
    %c0_i32_0 = arith.constant 0 : i32
    return %arg0, %arg1, %c0_i32 : i32, i32, i32
  }
  func.func @transform_1(%arg0: i32, %arg1: i32) -> (i32, i32) {
    %c0_i32 = arith.constant 0 : i32
    %c0_i32_0 = arith.constant 0 : i32
    %c0_i32_1 = arith.constant 0 : i32
    return %c0_i32, %c0_i32_0 : i32, i32
  }
  func.func @transform_2(%arg0: i32, %arg1: i32) -> (i32, i32) {
    %c0_i32 = arith.constant 0 : i32
    %c0_i32_0 = arith.constant 0 : i32
    %c0_i32_1 = arith.constant 0 : i32
    return %c0_i32, %c0_i32_0 : i32, i32
  }
  func.func @transform_3(%arg0: i32, %arg1: i32) -> (i32, i32) {
    %c0_i32 = arith.constant 0 : i32
    %c0_i32_0 = arith.constant 0 : i32
    %c0_i32_1 = arith.constant 0 : i32
    return %c0_i32, %c0_i32_0 : i32, i32
  }
  func.func @transform_4(%arg0: i32, %arg1: i32) -> (i32, i32, i32) {
    %c0_i32 = arith.constant 0 : i32
    %c0_i32_0 = arith.constant 0 : i32
    return %arg0, %arg1, %c0_i32 : i32, i32, i32
  }
  func.func @transform_5(%arg0: i32, %arg1: i32) -> (i32, i32, i32) {
    %c0_i32 = arith.constant 0 : i32
    %c0_i32_0 = arith.constant 0 : i32
    return %arg0, %arg1, %c0_i32 : i32, i32, i32
  }
}

</mosaic_0001>

<llo_original>
// kernel: tpu_custom_call.1
$region0: #{tpu_custom_call.1}
  #allocation0 [shape = 'u32[]', space=smem, size = 0x4, offset = 0x4, fixed_abs, tag = 'smem constant byte address 0x4 - core index']
  #allocation1 [shape = 'u32[144,128]{1,0:T(1,128)}', space=vmem, size = 0x12000, scoped, tag = 'internal scratch']
  %s0 = inlined_call_operand.hbm [shape: bf16[2,8,32], index: 0, kind: input, shape index: {}]
  %s1 = inlined_call_operand.hbm [shape: bf16[32,32], index: 1, kind: input, shape index: {}]
  %s2 = inlined_call_operand.hbm [shape: bf16[32,32], index: 2, kind: input, shape index: {}]
  %s3 = inlined_call_operand.hbm [shape: bf16[32,32], index: 3, kind: input, shape index: {}]
  %s4 = inlined_call_operand.hbm [shape: bf16[2,8,32], index: 4, kind: output, shape index: {0}]
  %s5 = inlined_call_operand.hbm [shape: bf16[2,8,32], index: 5, kind: output, shape index: {1}]
  %6 = xla_tuple %s4, %s5
  %s7 = sld [smem:[#allocation0]]
  $region73: #{tpu_custom_call.1} parent=0
    _
  %s9 = ssub.s32 1, %s7
  %s10 = scalar_select 0, %s9, %s7
  $region1: #{tpu_custom_call.1} parent=0
    #allocation2 [shape = 'u8[4096]{0}', space=vmem, size = 0x1000, scoped, tag = 'input window, operand 0']
    #allocation3 [shape = 's32[2]{0}', space=sflag, size = 0x8, scoped, tag = 'scoped memory for tpu_custom_call.1']
    #allocation4 [shape = 's32[2]{0}', space=sflag, size = 0x8, scoped, tag = 'scoped memory for tpu_custom_call.1']
    #allocation5 [shape = 'u8[8192]{0}', space=vmem, size = 0x2000, scoped, tag = 'input window, operand 1, single buffered']
    #allocation6 [shape = 's32[1]{0}', space=sflag, size = 0x4, scoped, tag = 'scoped memory for tpu_custom_call.1']
    #allocation7 [shape = 'u8[8192]{0}', space=vmem, size = 0x2000, scoped, tag = 'input window, operand 2, single buffered']
    #allocation8 [shape = 'u8[8192]{0}', space=vmem, size = 0x2000, scoped, tag = 'input window, operand 3, single buffered']
    #allocation9 [shape = 's32[1]{0}', space=sflag, size = 0x4, scoped, tag = 'scoped memory for tpu_custom_call.1']
    #allocation10 [shape = 'u8[4096]{0}', space=vmem, size = 0x1000, scoped, tag = 'output window, operand 0']
    #allocation11 [shape = 'u8[4096]{0}', space=vmem, size = 0x1000, scoped, tag = 'output window, operand 1']
    #allocation12 [shape = 's32[2]{0}', space=sflag, size = 0x8, scoped, tag = 'scoped memory for tpu_custom_call.1']
    %11 = vsyncpa [#allocation3], 0
    %s12 = scalar_lea.sflag [#allocation3], 1
    %13 = vsyncpa %s12, 0
    %14 = vsyncpa [#allocation6], 0
    %15 = vsyncpa [#allocation9], 0
    %16 = vsyncpa [#allocation4], 0
    %s17 = scalar_lea.sflag [#allocation4], 1
    %18 = vsyncpa %s17, 0
    %19 = vsyncpa [#allocation12], 0
    %s20 = scalar_lea.sflag [#allocation12], 1
    %21 = vsyncpa %s20, 0
    loop: start=0, step=1, limit=4
    $region2: #{tpu_custom_call.1} parent=1 // loop_pre_header
      _
    $region3: #{tpu_custom_call.1} parent=1 // loop_header
      %s23 = sphi 0, %s27
      %p24 = scmp.ge.s32.totalorder %s23, 4
      %s30 = sphi 0, %s42
      %s31 = sphi 0, %s38
      %s32 = sphi 0, %s30
      %s33 = sphi 0, %s31
      %s34 = sphi 0, %s32
      %s35 = sphi 0, %s33
      %s47 = sphi 0, %s49
      %s50 = sphi 0, %s47
      %s51 = sphi 0, %s50
      %s67 = sphi 0, %s51
      %s71 = sphi 0, %s71
      %s73 = sphi 0, %s71
      %s74 = sphi 0, %s73
      %s88 = sphi 0, %s74
      %s92 = sphi 0, %s92
      %s94 = sphi 0, %s92
      %s95 = sphi 0, %s94
      %s109 = sphi 0, %s95
      %s113 = sphi 0, %s113
      %s115 = sphi 0, %s113
      %s116 = sphi 0, %s115
      %s130 = sphi 0, %s116
      %s138 = sphi 0, %s140
      %s141 = sphi 0, %s138
      %s142 = sphi 0, %s141
      %s158 = sphi 0, %s142
      %s166 = sphi 0, %s168
      %s169 = sphi 0, %s166
      %s170 = sphi 0, %s169
      %s186 = sphi 0, %s170
    $region4: #{tpu_custom_call.1} parent=1 // loop_header_branch
      %26 = sbr.rel (%p24) target = $region8
    $region5: #{tpu_custom_call.1} parent=1 // loop_body
      %s28 = ssub.s32 %s23, 1
      %s29 = ssub.s32 %s23, 2
      %s36 = sadd.s32 1, %s31
      %p37 = scmp.ge.s32.totalorder %s36, 1
      %s38 = scalar_select %p37, 0, %s36
      %s39 = sadd.s32 1, %s30
      %s40 = scalar_select %p37, %s39, %s30
      %p41 = scmp.ge.s32.totalorder %s40, 2
      %s42 = scalar_select %p41, 0, %s40
      %s43 = ssub.s32 %s30, %s42
      %s44 = ssub.s32 %s31, %s38
      %s45 = sor.u32 %s43, %s44
      %p46 = scmp.eq.s32.totalorder %s45, 0
      %s48 = sadd.s32 %s47, 1
      %s49 = scalar_select %p46, %s47, %s48
      %p52 = pneg %p46
      %p53 = scmp.eq.s32.totalorder %s23, 1
      %p54 = por %p52, %p53
      %p55 = scmp.ne.s32.totalorder %s47, %s50
      %p56 = scmp.eq.s32.totalorder %s23, 0
      %p57 = por %p55, %p56
      %p58 = scmp.ne.s32.totalorder %s47, %s50
      %p59 = scmp.eq.s32.totalorder %s28, 1
      %p60 = por %p58, %p59
      %p61 = scmp.ne.s32.totalorder %s50, %s51
      %p62 = scmp.eq.s32.totalorder %s28, 0
      %p63 = por %p61, %p62
      %p64 = scmp.ne.s32.totalorder %s50, %s51
      %p65 = scmp.eq.s32.totalorder %s29, 1
      %p66 = por %p64, %p65
      %p68 = scmp.ne.s32.totalorder %s51, %s67
      %p69 = scmp.eq.s32.totalorder %s29, 0
      %p70 = por %p68, %p69
      %s72 = sadd.s32 %s71, 1
      %p75 = scmp.eq.s32.totalorder %s23, 1
      %p76 = scmp.ne.s32.totalorder %s71, %s73
      %p77 = scmp.eq.s32.totalorder %s23, 0
      %p78 = por %p76, %p77
      %p79 = scmp.ne.s32.totalorder %s71, %s73
      %p80 = scmp.eq.s32.totalorder %s28, 1
      %p81 = por %p79, %p80
      %p82 = scmp.ne.s32.totalorder %s73, %s74
      %p83 = scmp.eq.s32.totalorder %s28, 0
      %p84 = por %p82, %p83
      %p85 = scmp.ne.s32.totalorder %s73, %s74
      %p86 = scmp.eq.s32.totalorder %s29, 1
      %p87 = por %p85, %p86
      %p89 = scmp.ne.s32.totalorder %s74, %s88
      %p90 = scmp.eq.s32.totalorder %s29, 0
      %p91 = por %p89, %p90
      %s93 = sadd.s32 %s92, 1
      %p96 = scmp.eq.s32.totalorder %s23, 1
      %p97 = scmp.ne.s32.totalorder %s92, %s94
      %p98 = scmp.eq.s32.totalorder %s23, 0
      %p99 = por %p97, %p98
      %p100 = scmp.ne.s32.totalorder %s92, %s94
      %p101 = scmp.eq.s32.totalorder %s28, 1
      %p102 = por %p100, %p101
      %p103 = scmp.ne.s32.totalorder %s94, %s95
      %p104 = scmp.eq.s32.totalorder %s28, 0
      %p105 = por %p103, %p104
      %p106 = scmp.ne.s32.totalorder %s94, %s95
      %p107 = scmp.eq.s32.totalorder %s29, 1
      %p108 = por %p106, %p107
      %p110 = scmp.ne.s32.totalorder %s95, %s109
      %p111 = scmp.eq.s32.totalorder %s29, 0
      %p112 = por %p110, %p111
      %s114 = sadd.s32 %s113, 1
      %p117 = scmp.eq.s32.totalorder %s23, 1
      %p118 = scmp.ne.s32.totalorder %s113, %s115
      %p119 = scmp.eq.s32.totalorder %s23, 0
      %p120 = por %p118, %p119
      %p121 = scmp.ne.s32.totalorder %s113, %s115
      %p122 = scmp.eq.s32.totalorder %s28, 1
      %p123 = por %p121, %p122
      %p124 = scmp.ne.s32.totalorder %s115, %s116
      %p125 = scmp.eq.s32.totalorder %s28, 0
      %p126 = por %p124, %p125
      %p127 = scmp.ne.s32.totalorder %s115, %s116
      %p128 = scmp.eq.s32.totalorder %s29, 1
      %p129 = por %p127, %p128
      %p131 = scmp.ne.s32.totalorder %s116, %s130
      %p132 = scmp.eq.s32.totalorder %s29, 0
      %p133 = por %p131, %p132
      %s134 = ssub.s32 %s30, %s42
      %s135 = ssub.s32 %s31, %s38
      %s136 = sor.u32 %s134, %s135
      %p137 = scmp.eq.s32.totalorder %s136, 0
      %s139 = sadd.s32 %s138, 1
      %s140 = scalar_select %p137, %s138, %s139
      %p143 = pneg %p137
      %p144 = scmp.eq.s32.totalorder %s23, 1
      %p145 = por %p143, %p144
      %p146 = scmp.ne.s32.totalorder %s138, %s141
      %p147 = scmp.eq.s32.totalorder %s23, 0
      %p148 = por %p146, %p147
      %p149 = scmp.ne.s32.totalorder %s138, %s141
      %p150 = scmp.eq.s32.totalorder %s28, 1
      %p151 = por %p149, %p150
      %p152 = scmp.ne.s32.totalorder %s141, %s142
      %p153 = scmp.eq.s32.totalorder %s28, 0
      %p154 = por %p152, %p153
      %p155 = scmp.ne.s32.totalorder %s141, %s142
      %p156 = scmp.eq.s32.totalorder %s29, 1
      %p157 = por %p155, %p156
      %p159 = scmp.ne.s32.totalorder %s142, %s158
      %p160 = scmp.eq.s32.totalorder %s29, 0
      %p161 = por %p159, %p160
      %s162 = ssub.s32 %s30, %s42
      %s163 = ssub.s32 %s31, %s38
      %s164 = sor.u32 %s162, %s163
      %p165 = scmp.eq.s32.totalorder %s164, 0
      %s167 = sadd.s32 %s166, 1
      %s168 = scalar_select %p165, %s166, %s167
      %p171 = pneg %p165
      %p172 = scmp.eq.s32.totalorder %s23, 1
      %p173 = por %p171, %p172
      %p174 = scmp.ne.s32.totalorder %s166, %s169
      %p175 = scmp.eq.s32.totalorder %s23, 0
      %p176 = por %p174, %p175
      %p177 = scmp.ne.s32.totalorder %s166, %s169
      %p178 = scmp.eq.s32.totalorder %s28, 1
      %p179 = por %p177, %p178
      %p180 = scmp.ne.s32.totalorder %s169, %s170
      %p181 = scmp.eq.s32.totalorder %s28, 0
      %p182 = por %p180, %p181
      %p183 = scmp.ne.s32.totalorder %s169, %s170
      %p184 = scmp.eq.s32.totalorder %s29, 1
      %p185 = por %p183, %p184
      %p187 = scmp.ne.s32.totalorder %s170, %s186
      %p188 = scmp.eq.s32.totalorder %s29, 0
      %p189 = por %p187, %p188
      %p190 = scmp.le.s32.totalorder 1, %s23
      %p191 = scmp.lt.s32.totalorder %s23, 3
      %p192 = pnand %p190, %p191
      %p193 = pneg %p192
      // Predicated region
      $region9: #{tpu_custom_call.1} parent=5 // pred_check
        _
      $region10: #{tpu_custom_call.1} parent=5 // pred_check_branch
        %195 = sbr.rel (%p192) target = $region12
      $region11: #{tpu_custom_call.1} parent=5 // pred_region
        %s196 = ssub.s32 %s23, 1
        // Predicated region
        $region13: #{tpu_custom_call.1} parent=11 // pred_check
          %p197 = pneg %p84
        $region14: #{tpu_custom_call.1} parent=11 // pred_check_branch
          %199 = sbr.rel (%p197) target = $region16
        $region15: #{tpu_custom_call.1} parent=11 // pred_region
          %s201 = ssub.s32 256, 256
          %202 = vsyncadd [#allocation6], %s201
          %s203 = sshll.u32 [#allocation5], 4
          %s204 = int_to_ptr.vmem [resolvable:$true] %s203
          %209 = dma.hbm_to_vmem [thread:$0]  %s1, 256, %s204, [#allocation6], 64, 64, 4
        $region16: #{tpu_custom_call.1} parent=11 // pred_fallthru
          _
        // Predicated region
        $region17: #{tpu_custom_call.1} parent=11 // pred_check
          %p210 = pneg %p105
        $region18: #{tpu_custom_call.1} parent=11 // pred_check_branch
          %212 = sbr.rel (%p210) target = $region20
        $region19: #{tpu_custom_call.1} parent=11 // pred_region
          %s214 = ssub.s32 256, 256
          %215 = vsyncadd [#allocation6], %s214
          %s216 = sshll.u32 [#allocation7], 4
          %s217 = int_to_ptr.vmem [resolvable:$true] %s216
          %222 = dma.hbm_to_vmem [thread:$0]  %s2, 256, %s217, [#allocation6], 64, 64, 4
        $region20: #{tpu_custom_call.1} parent=11 // pred_fallthru
          _
        // Predicated region
        $region21: #{tpu_custom_call.1} parent=11 // pred_check
          %p223 = pneg %p126
        $region22: #{tpu_custom_call.1} parent=11 // pred_check_branch
          %225 = sbr.rel (%p223) target = $region24
        $region23: #{tpu_custom_call.1} parent=11 // pred_region
          %s227 = ssub.s32 256, 256
          %228 = vsyncadd [#allocation9], %s227
          %s229 = sshll.u32 [#allocation8], 4
          %s230 = int_to_ptr.vmem [resolvable:$true] %s229
          %235 = dma.hbm_to_vmem [thread:$0]  %s3, 256, %s230, [#allocation9], 64, 64, 4
        $region24: #{tpu_custom_call.1} parent=11 // pred_fallthru
          _
      $region12: #{tpu_custom_call.1} parent=5 // pred_fallthru
        _
      %p236 = scmp.lt.s32.totalorder %s23, 2
      // Predicated region
      $region25: #{tpu_custom_call.1} parent=5 // pred_check
        %p237 = pneg %p236
      $region26: #{tpu_custom_call.1} parent=5 // pred_check_branch
        %239 = sbr.rel (%p237) target = $region28
      $region27: #{tpu_custom_call.1} parent=5 // pred_region
        // Predicated region
        $region29: #{tpu_custom_call.1} parent=27 // pred_check
          %p240 = pneg %p57
        $region30: #{tpu_custom_call.1} parent=27 // pred_check_branch
          %242 = sbr.rel (%p240) target = $region32
        $region31: #{tpu_custom_call.1} parent=27 // pred_region
          %s243 = sand.u32 %s47, 1
          %s244 = scalar_lea.sflag [#allocation3], %s243
          %s245 = sand.u32 %s47, 1
          %s246 = smul.addr %s245, 4
          %s247 = scalar_lea.vmem [#allocation2], %s246
          %s249 = ssub.s32 64, 64
          %250 = vsyncadd %s244, %s249
          %s251 = sadd.s32 %s31, %s30
          %s252 = smul.addr %s251, 64
          %s253 = scalar_lea.hbm %s0, %s252
          %s255 = sshll.u32 %s247, 4
          %s256 = int_to_ptr.vmem [resolvable:$true] %s255
          %258 = dma.hbm_to_vmem [thread:$0]  %s253, 64, %s256, %s244
        $region32: #{tpu_custom_call.1} parent=27 // pred_fallthru
          _
      $region28: #{tpu_custom_call.1} parent=5 // pred_fallthru
        _
      %p259 = scmp.le.s32.totalorder 1, %s23
      %p260 = scmp.lt.s32.totalorder %s23, 3
      %p261 = pnand %p259, %p260
      %p262 = pneg %p261
      // Predicated region
      $region33: #{tpu_custom_call.1} parent=5 // pred_check
        _
      $region34: #{tpu_custom_call.1} parent=5 // pred_check_branch
        %264 = sbr.rel (%p261) target = $region36
      $region35: #{tpu_custom_call.1} parent=5 // pred_region
        %s265 = ssub.s32 %s23, 1
        %s266 = sand.u32 %s50, 1
        %s267 = scalar_lea.sflag [#allocation3], %s266
        %s268 = sand.u32 %s50, 1
        %s269 = smul.addr %s268, 4
        %s270 = scalar_lea.vmem [#allocation2], %s269
        // Predicated region
        $region37: #{tpu_custom_call.1} parent=35 // pred_check
          %p271 = pneg %p63
        $region38: #{tpu_custom_call.1} parent=35 // pred_check_branch
          %273 = sbr.rel (%p271) target = $region40
        $region39: #{tpu_custom_call.1} parent=35 // pred_region
          %274 = dma.done %s267, 64
        $region40: #{tpu_custom_call.1} parent=35 // pred_fallthru
          _
        // Predicated region
        $region41: #{tpu_custom_call.1} parent=35 // pred_check
          %p275 = pneg %p84
        $region42: #{tpu_custom_call.1} parent=35 // pred_check_branch
          %277 = sbr.rel (%p275) target = $region44
        $region43: #{tpu_custom_call.1} parent=35 // pred_region
          %278 = dma.done [#allocation6], 256
        $region44: #{tpu_custom_call.1} parent=35 // pred_fallthru
          _
        // Predicated region
        $region45: #{tpu_custom_call.1} parent=35 // pred_check
          %p279 = pneg %p105
        $region46: #{tpu_custom_call.1} parent=35 // pred_check_branch
          %281 = sbr.rel (%p279) target = $region48
        $region47: #{tpu_custom_call.1} parent=35 // pred_region
          %282 = dma.done [#allocation6], 256
        $region48: #{tpu_custom_call.1} parent=35 // pred_fallthru
          _
        // Predicated region
        $region49: #{tpu_custom_call.1} parent=35 // pred_check
          %p283 = pneg %p126
        $region50: #{tpu_custom_call.1} parent=35 // pred_check_branch
          %285 = sbr.rel (%p283) target = $region52
        $region51: #{tpu_custom_call.1} parent=35 // pred_region
          %286 = dma.done [#allocation9], 256
        $region52: #{tpu_custom_call.1} parent=35 // pred_fallthru
          _
        %s287 = sand.u32 %s50, 1
        %s288 = scalar_lea.sflag [#allocation3], %s287
        %s289 = sand.u32 %s50, 1
        %s290 = smul.addr %s289, 4
        %s291 = scalar_lea.vmem [#allocation2], %s290
        %p292 = pneg %p63
        %p293 = pneg %p60
        %p294 = pneg %p84
        %p295 = pneg %p81
        %p296 = pneg %p105
        %p297 = pneg %p102
        %p298 = pneg %p126
        %p299 = pneg %p123
        %p300 = pneg %p154
        %p301 = pneg %p151
        %s302 = sand.u32 %s141, 1
        %s303 = scalar_lea.sflag [#allocation4], %s302
        %s304 = sand.u32 %s141, 1
        %s305 = smul.addr %s304, 4
        %s306 = scalar_lea.vmem [#allocation10], %s305
        %p307 = pneg %p182
        %p308 = pneg %p179
        %s309 = sand.u32 %s169, 1
        %s310 = scalar_lea.sflag [#allocation12], %s309
        %s311 = sand.u32 %s169, 1
        %s312 = smul.addr %s311, 4
        %s313 = scalar_lea.vmem [#allocation11], %s312
        %v315 = vld [vmem:[%s270] sm:$0xf]
        %v316 = vld [vmem:[#allocation5] sm:$0xf]
        %v317 = vld [vmem:[#allocation5 + $0x4] sm:$0xf]
        %v318 = vld [vmem:[#allocation5 + $0x8] sm:$0xf]
        %v319 = vld [vmem:[#allocation5 + $0xc] sm:$0xf]
        %v324 = vunpack.c.l.b16 %v316
        %v325 = vunpack.c.l.b16 %v317
        %v326 = vunpack.c.l.b16 %v318
        %v327 = vunpack.c.l.b16 %v319
        %v328 = vpack.c.b16 %v325, %v324
        %v329 = vpack.c.b16 %v327, %v326
        %vm332 = vcmask 261120
        %v334 = vsel %vm332, %v315, 0
        %336 = vmatprep.subr.bf16.mxu0 0
        %337 = vmatpush1.bf16.msra.mxu0 %v328
        %338 = vmatprep.subr.bf16.mxu0 0
        %339 = vmatpush1.bf16.msra.mxu0 %v329
        %340 = vmatprep.subr.bf16.mxu0 0
        %341 = vmatpush1.bf16.msra.mxu0 0
        %342 = vmatprep.subr.bf16.mxu0 0
        %343 = vmatpush1.bf16.msra.mxu0 0
        %344 = vmatprep.subr.bf16.mxu0 0
        %345 = vmatpush1.bf16.msra.mxu0 0
        %346 = vmatprep.subr.bf16.mxu0 0
        %347 = vmatpush1.bf16.msra.mxu0 0
        %348 = vmatprep.subr.bf16.mxu0 0
        %349 = vmatpush1.bf16.msra.mxu0 0
        %350 = vmatprep.subr.bf16.mxu0 0
        %351 = vmatpush1.bf16.msra.mxu0 0
        %352 = vmatprep.subr.bf16.mxu0 0
        %353 = vmatpush1.bf16.msra.mxu0 0
        %354 = vmatprep.subr.bf16.mxu0 0
        %355 = vmatpush1.bf16.msra.mxu0 0
        %356 = vmatprep.subr.bf16.mxu0 0
        %357 = vmatpush1.bf16.msra.mxu0 0
        %358 = vmatprep.subr.bf16.mxu0 0
        %359 = vmatpush1.bf16.msra.mxu0 0
        %360 = vmatprep.subr.bf16.mxu0 0
        %361 = vmatpush1.bf16.msra.mxu0 0
        %362 = vmatprep.subr.bf16.mxu0 0
        %363 = vmatpush1.bf16.msra.mxu0 0
        %364 = vmatprep.subr.bf16.mxu0 0
        %365 = vmatpush1.bf16.msra.mxu0 0
        %366 = vmatprep.subr.bf16.mxu0 0
        %367 = vmatpush1.bf16.msra.mxu0 0
        %368 = vmatprep.mubr.bf16.mxu0 0
        %369 = vmatmul.mubr.bf16.gmra.mrb[0].mxu0 %v334
        %v370 = vpop.f32.mrb[0].mxu0
        %v371 = vadd.f32 0.0, %v370
        %v372 = vpop.f32.mrb[0].mxu0
        %v373 = vpop.f32.mrb[0].mxu0
        %v374 = vpop.f32.mrb[0].mxu0
        %375 = vdwg.mxu0
        %v376 = vxor.u32 %v371, 2147483648
        %v377 = vmul.f32 %v376, 1.442695
        %v378 = vpow.pop %v377
        %v379 = vadd.f32 %v378, 1.0
        %v380 = vrcp.pop %v379
        %v381 = vmul.f32 1.0, %v380
        %v382 = vpack.c.bf16 %v381, %v381
        %v383 = vld [vmem:[#allocation8] sm:$0xf]
        %v384 = vld [vmem:[#allocation8 + $0x4] sm:$0xf]
        %v385 = vld [vmem:[#allocation8 + $0x8] sm:$0xf]
        %v386 = vld [vmem:[#allocation8 + $0xc] sm:$0xf]
        %v391 = vunpack.c.l.b16 %v383
        %v392 = vunpack.c.l.b16 %v384
        %v393 = vunpack.c.l.b16 %v385
        %v394 = vunpack.c.l.b16 %v386
        %v395 = vpack.c.b16 %v392, %v391
        %v396 = vpack.c.b16 %v394, %v393
        %v400 = vsel %vm332, %v382, 0
        %402 = vmatprep.subr.bf16.mxu0 0
        %403 = vmatpush1.bf16.msra.mxu0 %v395
        %404 = vmatprep.subr.bf16.mxu0 0
        %405 = vmatpush1.bf16.msra.mxu0 %v396
        %406 = vmatprep.subr.bf16.mxu0 0
        %407 = vmatpush1.bf16.msra.mxu0 0
        %408 = vmatprep.subr.bf16.mxu0 0
        %409 = vmatpush1.bf16.msra.mxu0 0
        %410 = vmatprep.subr.bf16.mxu0 0
        %411 = vmatpush1.bf16.msra.mxu0 0
        %412 = vmatprep.subr.bf16.mxu0 0
        %413 = vmatpush1.bf16.msra.mxu0 0
        %414 = vmatprep.subr.bf16.mxu0 0
        %415 = vmatpush1.bf16.msra.mxu0 0
        %416 = vmatprep.subr.bf16.mxu0 0
        %417 = vmatpush1.bf16.msra.mxu0 0
        %418 = vmatprep.subr.bf16.mxu0 0
        %419 = vmatpush1.bf16.msra.mxu0 0
        %420 = vmatprep.subr.bf16.mxu0 0
        %421 = vmatpush1.bf16.msra.mxu0 0
        %422 = vmatprep.subr.bf16.mxu0 0
        %423 = vmatpush1.bf16.msra.mxu0 0
        %424 = vmatprep.subr.bf16.mxu0 0
        %425 = vmatpush1.bf16.msra.mxu0 0
        %426 = vmatprep.subr.bf16.mxu0 0
        %427 = vmatpush1.bf16.msra.mxu0 0
        %428 = vmatprep.subr.bf16.mxu0 0
        %429 = vmatpush1.bf16.msra.mxu0 0
        %430 = vmatprep.subr.bf16.mxu0 0
        %431 = vmatpush1.bf16.msra.mxu0 0
        %432 = vmatprep.subr.bf16.mxu0 0
        %433 = vmatpush1.bf16.msra.mxu0 0
        %434 = vmatprep.mubr.bf16.mxu0 0
        %435 = vmatmul.mubr.bf16.gmra.mrb[0].mxu0 %v400
        %v436 = vpop.f32.mrb[0].mxu0
        %v437 = vadd.f32 0.0, %v436
        %v438 = vpop.f32.mrb[0].mxu0
        %v439 = vpop.f32.mrb[0].mxu0
        %v440 = vpop.f32.mrb[0].mxu0
        %441 = vdwg.mxu0
        %v442 = vpack.c.bf16 %v437, %v437
        %vm443 = vcmask 257024
        %444 = vst.msk [vmem:[%s306] sm:$0xf] %vm443, %v442
        %v445 = vld [vmem:[#allocation7] sm:$0xf]
        %v446 = vld [vmem:[#allocation7 + $0x4] sm:$0xf]
        %v447 = vld [vmem:[#allocation7 + $0x8] sm:$0xf]
        %v448 = vld [vmem:[#allocation7 + $0xc] sm:$0xf]
        %v453 = vunpack.c.l.b16 %v445
        %v454 = vunpack.c.l.b16 %v446
        %v455 = vunpack.c.l.b16 %v447
        %v456 = vunpack.c.l.b16 %v448
        %v457 = vpack.c.b16 %v454, %v453
        %v458 = vpack.c.b16 %v456, %v455
        %461 = vmatprep.subr.bf16.mxu0 0
        %462 = vmatpush1.bf16.msra.mxu0 %v457
        %463 = vmatprep.subr.bf16.mxu0 0
        %464 = vmatpush1.bf16.msra.mxu0 %v458
        %465 = vmatprep.subr.bf16.mxu0 0
        %466 = vmatpush1.bf16.msra.mxu0 0
        %467 = vmatprep.subr.bf16.mxu0 0
        %468 = vmatpush1.bf16.msra.mxu0 0
        %469 = vmatprep.subr.bf16.mxu0 0
        %470 = vmatpush1.bf16.msra.mxu0 0
        %471 = vmatprep.subr.bf16.mxu0 0
        %472 = vmatpush1.bf16.msra.mxu0 0
        %473 = vmatprep.subr.bf16.mxu0 0
        %474 = vmatpush1.bf16.msra.mxu0 0
        %475 = vmatprep.subr.bf16.mxu0 0
        %476 = vmatpush1.bf16.msra.mxu0 0
        %477 = vmatprep.subr.bf16.mxu0 0
        %478 = vmatpush1.bf16.msra.mxu0 0
        %479 = vmatprep.subr.bf16.mxu0 0
        %480 = vmatpush1.bf16.msra.mxu0 0
        %481 = vmatprep.subr.bf16.mxu0 0
        %482 = vmatpush1.bf16.msra.mxu0 0
        %483 = vmatprep.subr.bf16.mxu0 0
        %484 = vmatpush1.bf16.msra.mxu0 0
        %485 = vmatprep.subr.bf16.mxu0 0
        %486 = vmatpush1.bf16.msra.mxu0 0
        %487 = vmatprep.subr.bf16.mxu0 0
        %488 = vmatpush1.bf16.msra.mxu0 0
        %489 = vmatprep.subr.bf16.mxu0 0
        %490 = vmatpush1.bf16.msra.mxu0 0
        %491 = vmatprep.subr.bf16.mxu0 0
        %492 = vmatpush1.bf16.msra.mxu0 0
        %493 = vmatprep.mubr.bf16.mxu0 0
        %494 = vmatmul.mubr.bf16.gmra.mrb[0].mxu0 %v334
        %v495 = vpop.f32.mrb[0].mxu0
        %v496 = vadd.f32 0.0, %v495
        %v497 = vpop.f32.mrb[0].mxu0
        %v498 = vpop.f32.mrb[0].mxu0
        %v499 = vpop.f32.mrb[0].mxu0
        %500 = vdwg.mxu0
        %v501 = vpack.c.bf16 %v496, %v496
        %502 = vst.msk [vmem:[%s313] sm:$0xf] %vm443, %v501
        %s503 = sand.u32 %s141, 1
        %s504 = scalar_lea.sflag [#allocation4], %s503
        %s505 = sand.u32 %s141, 1
        %s506 = smul.addr %s505, 4
        %s507 = scalar_lea.vmem [#allocation10], %s506
        %s508 = sand.u32 %s169, 1
        %s509 = scalar_lea.sflag [#allocation12], %s508
        %s510 = sand.u32 %s169, 1
        %s511 = smul.addr %s510, 4
        %s512 = scalar_lea.vmem [#allocation11], %s511
        // Predicated region
        $region53: #{tpu_custom_call.1} parent=35 // pred_check
          %p513 = pneg %p151
        $region54: #{tpu_custom_call.1} parent=35 // pred_check_branch
          %515 = sbr.rel (%p513) target = $region56
        $region55: #{tpu_custom_call.1} parent=35 // pred_region
          %s517 = ssub.s32 64, 64
          %518 = vsyncadd %s504, %s517
          %s519 = sadd.s32 %s33, %s32
          %s520 = smul.addr %s519, 64
          %s521 = scalar_lea.hbm %s4, %s520
          %s523 = sshll.u32 %s507, 4
          %s524 = int_to_ptr.vmem [resolvable:$true] %s523
          %526 = dma.vmem_to_hbm [thread:$0]  %s524, 64, %s521, %s504
        $region56: #{tpu_custom_call.1} parent=35 // pred_fallthru
          _
        // Predicated region
        $region57: #{tpu_custom_call.1} parent=35 // pred_check
          %p527 = pneg %p179
        $region58: #{tpu_custom_call.1} parent=35 // pred_check_branch
          %529 = sbr.rel (%p527) target = $region60
        $region59: #{tpu_custom_call.1} parent=35 // pred_region
          %s531 = ssub.s32 64, 64
          %532 = vsyncadd %s509, %s531
          %s533 = sadd.s32 %s33, %s32
          %s534 = smul.addr %s533, 64
          %s535 = scalar_lea.hbm %s5, %s534
          %s537 = sshll.u32 %s512, 4
          %s538 = int_to_ptr.vmem [resolvable:$true] %s537
          %540 = dma.vmem_to_hbm [thread:$0]  %s538, 64, %s535, %s509
        $region60: #{tpu_custom_call.1} parent=35 // pred_fallthru
          _
      $region36: #{tpu_custom_call.1} parent=5 // pred_fallthru
        _
      %p541 = scmp.le.s32.totalorder 2, %s23
      // Predicated region
      $region61: #{tpu_custom_call.1} parent=5 // pred_check
        %p542 = pneg %p541
      $region62: #{tpu_custom_call.1} parent=5 // pred_check_branch
        %544 = sbr.rel (%p542) target = $region64
      $region63: #{tpu_custom_call.1} parent=5 // pred_region
        %s545 = ssub.s32 %s23, 2
        // Predicated region
        $region65: #{tpu_custom_call.1} parent=63 // pred_check
          %p546 = pneg %p157
        $region66: #{tpu_custom_call.1} parent=63 // pred_check_branch
          %548 = sbr.rel (%p546) target = $region68
        $region67: #{tpu_custom_call.1} parent=63 // pred_region
          %s549 = sand.u32 %s142, 1
          %s550 = scalar_lea.sflag [#allocation4], %s549
          %s551 = sand.u32 %s142, 1
          %s552 = smul.addr %s551, 4
          %s553 = scalar_lea.vmem [#allocation10], %s552
          %554 = dma.done %s550, 64
        $region68: #{tpu_custom_call.1} parent=63 // pred_fallthru
          _
        // Predicated region
        $region69: #{tpu_custom_call.1} parent=63 // pred_check
          %p555 = pneg %p185
        $region70: #{tpu_custom_call.1} parent=63 // pred_check_branch
          %557 = sbr.rel (%p555) target = $region72
        $region71: #{tpu_custom_call.1} parent=63 // pred_region
          %s558 = sand.u32 %s170, 1
          %s559 = scalar_lea.sflag [#allocation12], %s558
          %s560 = sand.u32 %s170, 1
          %s561 = smul.addr %s560, 4
          %s562 = scalar_lea.vmem [#allocation11], %s561
          %563 = dma.done %s559, 64
        $region72: #{tpu_custom_call.1} parent=63 // pred_fallthru
          _
      $region64: #{tpu_custom_call.1} parent=5 // pred_fallthru
        _
    $region6: #{tpu_custom_call.1} parent=1 // loop_footer
      %s27 = sadd.s32 1, %s23
    $region7: #{tpu_custom_call.1} parent=1 // loop_footer_branch
      %22 = sbr.rel target = $region3
    $region8: #{tpu_custom_call.1} parent=1 // loop_exit
      _
    %564 = vsyncpa [#allocation3], 1
    %s565 = scalar_lea.sflag [#allocation3], 1
    %566 = vsyncpa %s565, 1
    %567 = vsyncpa [#allocation6], 1
    %568 = vsyncpa [#allocation9], 1
    %569 = vsyncpa [#allocation4], 1
    %s570 = scalar_lea.sflag [#allocation4], 1
    %571 = vsyncpa %s570, 1
    %572 = vsyncpa [#allocation12], 1
    %s573 = scalar_lea.sflag [#allocation12], 1
    %574 = vsyncpa %s573, 1

</llo_original>
